<compile_context>
chip_gen: v6e
topology: v6e:2x2x1
jax: 0.10.0
libtpu: 0.0.40
codegen_flags: <defaults>
</compile_context>

<pallas_src>
import functools

import jax
import jax.numpy as jnp
from jax.experimental import pallas as pl
from jax.experimental.pallas import tpu as pltpu


# ----------------------------------------------------------------------------
# Kernels
# ----------------------------------------------------------------------------
def _single_pass_kernel(x_ref, w1_ref, b1_ref, w2_ref, b2_ref, o_ref):
    """x_ref: [bt, C, HW]; w1 [C, Cr]; b1 [1, Cr]; w2 [Cr, C]; b2 [1, C]."""
    x = x_ref[...].astype(jnp.float32)                      # [bt, C, HW]
    bt = x.shape[0]

    avg_pool = jnp.mean(x, axis=-1)                         # [bt, C]
    max_pool = jnp.max(x, axis=-1)                          # [bt, C]

    # Fuse the two MLP passes: one pair of MXU dots on the stacked [2*bt, C].
    pooled = jnp.concatenate([avg_pool, max_pool], axis=0)  # [2*bt, C]
    h = jnp.dot(pooled, w1_ref[...], preferred_element_type=jnp.float32)
    h = jnp.maximum(h + b1_ref[...], 0.0)                   # ReLU
    logits2 = jnp.dot(h, w2_ref[...], preferred_element_type=jnp.float32)
    logits2 = logits2 + b2_ref[...]                         # [2*bt, C]

    attn = jax.nn.sigmoid(logits2[:bt] + logits2[bt:])      # [bt, C]
    # Gate the input directly into the output tile (cast back to I/O dtype).
    o_ref[...] = (x * attn[:, :, None]).astype(o_ref.dtype)


def _pool_mlp_kernel(x_ref, w1_ref, b1_ref, w2_ref, b2_ref, attn_ref,
                     sum_sc, max_sc, *, hw_total, hw_tile):
    """Two-pass path, pass 1: accumulate sum/max over HW tiles, emit attention.

    x_ref: [1, C, hw_tile]; attn_ref: [1, 1, C]; sum_sc / max_sc: [1, C] f32.
    Grid = (B, n_hw) with the spatial axis as the (last, "arbitrary") reduction.
    """
    hw_i = pl.program_id(1)
    n_hw = pl.num_programs(1)

    x = x_ref[...].astype(jnp.float32)                      # [1, C, hw_tile]

    # Mask out-of-range lanes of the (possibly ragged) spatial tail tile.
    lane = jax.lax.broadcasted_iota(jnp.int32, x.shape, 2) + hw_i * hw_tile
    valid = lane < hw_total
    part_sum = jnp.sum(jnp.where(valid, x, 0.0), axis=-1)       # [1, C]
    part_max = jnp.max(jnp.where(valid, x, -jnp.inf), axis=-1)  # [1, C]

    @pl.when(hw_i == 0)
    def _():
        sum_sc[...] = jnp.zeros_like(sum_sc)
        max_sc[...] = jnp.full_like(max_sc, -jnp.inf)

    sum_sc[...] = sum_sc[...] + part_sum
    max_sc[...] = jnp.maximum(max_sc[...], part_max)

    @pl.when(hw_i == n_hw - 1)
    def _():
        avg_pool = sum_sc[...] * (1.0 / float(hw_total))        # [1, C]
        pooled = jnp.concatenate([avg_pool, max_sc[...]], axis=0)   # [2, C]
        h = jnp.dot(pooled, w1_ref[...], preferred_element_type=jnp.float32)
        h = jnp.maximum(h + b1_ref[...], 0.0)
        logits2 = jnp.dot(h, w2_ref[...], preferred_element_type=jnp.float32)
        logits2 = logits2 + b2_ref[...]                          # [2, C]
        attn = jax.nn.sigmoid(logits2[:1] + logits2[1:])         # [1, C]
        attn_ref[...] = attn[:, None, :]                         # [1, 1, C]


def _apply_kernel(x_ref, attn_ref, o_ref):
    """Two-pass path, pass 2: gate x by the channel attention (fully parallel)."""
    x = x_ref[...].astype(jnp.float32)          # [1, C, hw_tile]
    o_ref[...] = (x * attn_ref[...]).astype(o_ref.dtype)   # attn: [1, C, 1] f32


# ----------------------------------------------------------------------------
# Wrapper
# ----------------------------------------------------------------------------
def _vmem_policy():
    """Generation-aware (block_budget_bytes, vmem_limit_bytes)."""
    try:
        cap = int(pltpu.get_tpu_info().vmem_capacity_bytes)
    except Exception:
        cap = 0
    if cap >= 100 * (1 << 20):
        # v5e / v6e class parts: 128 MiB physical VMEM -- use most of it.
        return 64 * (1 << 20), 100 * (1 << 20)
    # v7x (64 MiB physical VMEM) or unknown generation: stay conservative.
    return 24 * (1 << 20), 32 * (1 << 20)


def _pick_hw_tile(avail_bytes, bytes_per_lane, hw_total, override=None):
    """Largest multiple-of-128 spatial tile fitting the budget (or full HW)."""
    if override is not None:
        t = int(override)
    else:
        t = avail_bytes // max(bytes_per_lane, 1)
    t = max(128, (t // 128) * 128)
    return hw_total if t >= hw_total else t


def channel_filter(x, w1, b1, w2, b2, *, force_two_pass=False,
                   vmem_block_budget_bytes=None, spatial_tile=None):
    """x: [B, C, H, W] (NCHW, matching the PyTorch module).

    Weights are stored input-major: w1 [C, Cr], w2 [Cr, C]; biases [1, *].
    """
    B, C, H, W = x.shape
    HW = H * W
    Cr = w1.shape[1]

    x_flat = x.reshape(B, C, HW)
    x_bytes = x.dtype.itemsize
    o_bytes = x_bytes
    w_bytes = (C * Cr + Cr + Cr * C + C) * w1.dtype.itemsize

    block_budget, vmem_limit = _vmem_policy()
    if vmem_block_budget_bytes is not None:
        block_budget = int(vmem_block_budget_bytes)
    # Weights use constant index maps (fetched once) but Pallas still allocates
    # double buffers for them; account for that in the budget.
    avail = max(block_budget - 2 * w_bytes, 0)

    # Double-buffered (input + output) bytes for one sample's [C, HW] slab.
    per_sample_block = 2 * C * HW * (x_bytes + o_bytes)
    single_pass = (per_sample_block <= avail) and not force_two_pass

    if single_pass:
        # Target <= ~16 MiB blocks (already near HBM roofline), keep at least
        # min(B, 4) grid steps so the DMA pipeline and both v7x TensorCores
        # stay busy, and accept a padded tail block (no divisor hunting).
        target = min(avail, 16 * (1 << 20))
        b_tile = max(1, min(B, target // per_sample_block))
        min_steps = min(B, 4)
        if pl.cdiv(B, b_tile) < min_steps:
            b_tile = max(1, B // min_steps)
        grid = (pl.cdiv(B, b_tile),)

        cost = pl.CostEstimate(
            flops=3 * B * C * HW + 8 * B * C * Cr,
            transcendentals=B * C,
            bytes_accessed=B * C * HW * (x_bytes + o_bytes) + w_bytes,
        )
        out_flat = pl.pallas_call(
            _single_pass_kernel,
            out_shape=jax.ShapeDtypeStruct((B, C, HW), x.dtype),
            grid=grid,
            in_specs=[
                pl.BlockSpec((b_tile, C, HW), lambda b: (b, 0, 0)),
                pl.BlockSpec((C, Cr), lambda b: (0, 0)),
                pl.BlockSpec((1, Cr), lambda b: (0, 0)),
                pl.BlockSpec((Cr, C), lambda b: (0, 0)),
                pl.BlockSpec((1, C), lambda b: (0, 0)),
            ],
            out_specs=pl.BlockSpec((b_tile, C, HW), lambda b: (b, 0, 0)),
            compiler_params=pltpu.CompilerParams(
                dimension_semantics=("parallel",),
                vmem_limit_bytes=vmem_limit,
            ),
            cost_estimate=cost,
        )(x_flat, w1, b1, w2, b2)
        return out_flat.reshape(B, C, H, W)

    # ---- two-pass path: HW-tiled pooling reduction, then parallel apply ----
    thw1 = _pick_hw_tile(avail, 2 * C * x_bytes, HW, spatial_tile)
    thw2 = _pick_hw_tile(avail, 2 * C * (x_bytes + o_bytes), HW, spatial_tile)
    n_hw1 = pl.cdiv(HW, thw1)
    n_hw2 = pl.cdiv(HW, thw2)

    pool_cost = pl.CostEstimate(
        flops=2 * B * C * HW + 8 * B * C * Cr,
        transcendentals=B * C,
        bytes_accessed=B * C * HW * x_bytes + w_bytes + B * C * 4,
    )
    attn = pl.pallas_call(
        functools.partial(_pool_mlp_kernel, hw_total=HW, hw_tile=thw1),
        out_shape=jax.ShapeDtypeStruct((B, 1, C), jnp.float32),
        grid=(B, n_hw1),
        in_specs=[
            pl.BlockSpec((1, C, thw1), lambda b, h: (b, 0, h)),
            pl.BlockSpec((C, Cr), lambda b, h: (0, 0)),
            pl.BlockSpec((1, Cr), lambda b, h: (0, 0)),
            pl.BlockSpec((Cr, C), lambda b, h: (0, 0)),
            pl.BlockSpec((1, C), lambda b, h: (0, 0)),
        ],
        out_specs=pl.BlockSpec((1, 1, C), lambda b, h: (b, 0, 0)),
        scratch_shapes=[pltpu.VMEM((1, C), jnp.float32),
                        pltpu.VMEM((1, C), jnp.float32)],
        compiler_params=pltpu.CompilerParams(
            dimension_semantics=("parallel", "arbitrary"),
            vmem_limit_bytes=vmem_limit,
        ),
        cost_estimate=pool_cost,
    )(x_flat, w1, b1, w2, b2)

    # [B, 1, C] -> [B, C, 1]: identical row-major order, cheap metadata reshape.
    attn_col = attn.reshape(B, C, 1)

    apply_cost = pl.CostEstimate(
        flops=B * C * HW,
        transcendentals=0,
        bytes_accessed=B * C * HW * (x_bytes + o_bytes) + B * C * 4,
    )
    out_flat = pl.pallas_call(
        _apply_kernel,
        out_shape=jax.ShapeDtypeStruct((B, C, HW), x.dtype),
        grid=(B, n_hw2),
        in_specs=[
            pl.BlockSpec((1, C, thw2), lambda b, h: (b, 0, h)),
            pl.BlockSpec((1, C, 1), lambda b, h: (b, 0, 0)),
        ],
        out_specs=pl.BlockSpec((1, C, thw2), lambda b, h: (b, 0, h)),
        compiler_params=pltpu.CompilerParams(
            dimension_semantics=("parallel", "parallel"),
            vmem_limit_bytes=vmem_limit,
        ),
        cost_estimate=apply_cost,
    )(x_flat, attn_col)
    return out_flat.reshape(B, C, H, W)


# ----------------------------------------------------------------------------
# Pure-JAX reference mirroring the PyTorch forward
# ----------------------------------------------------------------------------
def reference(x, w1, b1, w2, b2):
    xf = x.astype(jnp.float32)
    avg_pool = jnp.mean(xf, axis=(2, 3))                 # [B, C]
    max_pool = jnp.max(xf, axis=(2, 3))                  # [B, C]

    def mlp(v):
        h = jnp.maximum(v @ w1 + b1[0], 0.0)
        return h @ w2 + b2[0]

    attn = jax.nn.sigmoid(mlp(avg_pool) + mlp(max_pool))
    return (attn[:, :, None, None] * xf).astype(x.dtype)


if __name__ == "__main__":
    key = jax.random.PRNGKey(0)
    kx, k1, kb1, k2, kb2 = jax.random.split(key, 5)

    # Module config: in_channel=4, reduction_ratio=2 -> Linear(4->2), Linear(2->4)
    C, Cr = 4, 2
    w1 = jax.random.normal(k1, (C, Cr), dtype=jnp.float32) * 0.5
    b1 = jax.random.normal(kb1, (1, Cr), dtype=jnp.float32) * 0.1
    w2 = jax.random.normal(k2, (Cr, C), dtype=jnp.float32) * 0.5
    b2 = jax.random.normal(kb2, (1, C), dtype=jnp.float32) * 0.1

    def check(out, ref, atol, rtol, name):
        assert out.shape == ref.shape, name
        ok = jnp.allclose(out.astype(jnp.float32), ref.astype(jnp.float32),
                          atol=atol, rtol=rtol)
        assert bool(ok), f"mismatch vs reference: {name}"

    # 1) single-pass path, lane-dense HW (matches the module test shape).
    x = jax.random.normal(kx, (2, C, 16, 16), dtype=jnp.float32)
    out = jax.block_until_ready(channel_filter(x, w1, b1, w2, b2))
    check(out, reference(x, w1, b1, w2, b2), 1e-5, 1e-5, "single-pass f32")

    # 2) single-pass with a batch tile that does not divide B (padded tail block).
    x9 = jax.random.normal(jax.random.PRNGKey(1), (9, C, 8, 8), dtype=jnp.float32)
    out9 = jax.block_until_ready(channel_filter(x9, w1, b1, w2, b2))
    check(out9, reference(x9, w1, b1, w2, b2), 1e-5, 1e-5, "single-pass padded tail")

    # 3) two-pass path (HW-tiled reduction + parallel apply) with a ragged tail tile.
    x12 = jax.random.normal(jax.random.PRNGKey(2), (2, C, 12, 12), dtype=jnp.float32)
    out12 = jax.block_until_ready(
        channel_filter(x12, w1, b1, w2, b2, force_two_pass=True, spatial_tile=128))
    check(out12, reference(x12, w1, b1, w2, b2), 1e-5, 1e-5, "two-pass f32")

    # 4) bf16 data path (I/O in bf16, pooling / MLP / gating in f32).
    xb = x.astype(jnp.bfloat16)
    outb = jax.block_until_ready(channel_filter(xb, w1, b1, w2, b2))
    check(outb, reference(xb, w1, b1, w2, b2), 5e-2, 5e-2, "single-pass bf16")

    print("KERNEL_OK")
</pallas_src>

<mosaic_0001>
module attributes {stable_mosaic.version = 11 : i64} {
  func.func @_single_pass_kernel(%arg0: i32, %arg1: memref<1x4x256xf32, #tpu.memory_space<vmem>>, %arg2: memref<4x2xf32, #tpu.memory_space<vmem>>, %arg3: memref<1x2xf32, #tpu.memory_space<vmem>>, %arg4: memref<2x4xf32, #tpu.memory_space<vmem>>, %arg5: memref<1x4xf32, #tpu.memory_space<vmem>>, %arg6: memref<1x4x256xf32, #tpu.memory_space<vmem>>) attributes {dimension_semantics = [#tpu.dimension_semantics<parallel>], iteration_bounds = array<i64: 2>, scalar_prefetch = 0 : i64, scratch_operands = 0 : i64, tpu.core_type = #tpu.core_type<tc>, window_params = [{transform_indices = @transform_0, window_bounds = array<i64: 1, 4, 256>}, {pipeline_mode = #tpu.pipeline_mode<synchronous>, transform_indices = @transform_1, window_bounds = array<i64: 4, 2>}, {pipeline_mode = #tpu.pipeline_mode<synchronous>, transform_indices = @transform_2, window_bounds = array<i64: 1, 2>}, {pipeline_mode = #tpu.pipeline_mode<synchronous>, transform_indices = @transform_3, window_bounds = array<i64: 2, 4>}, {pipeline_mode = #tpu.pipeline_mode<synchronous>, transform_indices = @transform_4, window_bounds = array<i64: 1, 4>}, {transform_indices = @transform_5, window_bounds = array<i64: 1, 4, 256>}]} {
    %c0 = arith.constant 0 : index
    %c0_0 = arith.constant 0 : index
    %c0_1 = arith.constant 0 : index
    %0 = vector.load %arg1[%c0, %c0_0, %c0_1] : memref<1x4x256xf32, #tpu.memory_space<vmem>>, vector<1x4x256xf32>
    %cst = arith.constant dense<0.000000e+00> : vector<1x4xf32>
    %1 = vector.multi_reduction <add>, %0, %cst [2] : vector<1x4x256xf32> to vector<1x4xf32>
    %cst_2 = arith.constant 2.560000e+02 : f32
    %2 = vector.broadcast %cst_2 : f32 to vector<1x4xf32>
    %3 = arith.divf %1, %2 : vector<1x4xf32>
    %cst_3 = arith.constant dense<0xFF800000> : vector<1x4xf32>
    %4 = vector.multi_reduction <maximumf>, %0, %cst_3 [2] : vector<1x4x256xf32> to vector<1x4xf32>
    %5 = tpu.concatenate %3, %4 in 0 : vector<1x4xf32>, vector<1x4xf32> -> vector<2x4xf32>
    %c0_4 = arith.constant 0 : index
    %c0_5 = arith.constant 0 : index
    %6 = vector.load %arg2[%c0_4, %c0_5] : memref<4x2xf32, #tpu.memory_space<vmem>>, vector<4x2xf32>
    %cst_6 = arith.constant dense<0.000000e+00> : vector<2x2xf32>
    %7 = tpu.matmul %5, %6, %cst_6 {dimension_numbers = #tpu.dot_dimension_numbers<[1], [0], [0], [1], [0, 0, 1, 1], [], []>} : vector<2x4xf32>, vector<4x2xf32>, vector<2x2xf32> -> vector<2x2xf32>
    %c0_7 = arith.constant 0 : index
    %c0_8 = arith.constant 0 : index
    %8 = vector.load %arg3[%c0_7, %c0_8] : memref<1x2xf32, #tpu.memory_space<vmem>>, vector<1x2xf32>
    %9 = vector.broadcast %8 : vector<1x2xf32> to vector<2x2xf32>
    %10 = arith.addf %7, %9 : vector<2x2xf32>
    %cst_9 = arith.constant 0.000000e+00 : f32
    %11 = vector.broadcast %cst_9 : f32 to vector<2x2xf32>
    %12 = arith.maximumf %10, %11 : vector<2x2xf32>
    %c0_10 = arith.constant 0 : index
    %c0_11 = arith.constant 0 : index
    %13 = vector.load %arg4[%c0_10, %c0_11] : memref<2x4xf32, #tpu.memory_space<vmem>>, vector<2x4xf32>
    %cst_12 = arith.constant dense<0.000000e+00> : vector<2x4xf32>
    %14 = tpu.matmul %12, %13, %cst_12 {dimension_numbers = #tpu.dot_dimension_numbers<[1], [0], [0], [1], [0, 0, 1, 1], [], []>} : vector<2x2xf32>, vector<2x4xf32>, vector<2x4xf32> -> vector<2x4xf32>
    %c0_13 = arith.constant 0 : index
    %c0_14 = arith.constant 0 : index
    %15 = vector.load %arg5[%c0_13, %c0_14] : memref<1x4xf32, #tpu.memory_space<vmem>>, vector<1x4xf32>
    %16 = vector.broadcast %15 : vector<1x4xf32> to vector<2x4xf32>
    %17 = arith.addf %14, %16 : vector<2x4xf32>
    %18 = vector.extract_strided_slice %17 {offsets = [0, 0], sizes = [1, 4], strides = [1, 1]} : vector<2x4xf32> to vector<1x4xf32>
    %19 = vector.extract_strided_slice %17 {offsets = [1, 0], sizes = [1, 4], strides = [1, 1]} : vector<2x4xf32> to vector<1x4xf32>
    %20 = arith.addf %18, %19 : vector<1x4xf32>
    %21 = arith.negf %20 : vector<1x4xf32>
    %22 = math.exp %21 : vector<1x4xf32>
    %cst_15 = arith.constant 1.000000e+00 : f32
    %23 = vector.broadcast %cst_15 : f32 to vector<1x4xf32>
    %24 = arith.addf %23, %22 : vector<1x4xf32>
    %25 = arith.divf %23, %24 : vector<1x4xf32>
    %26 = vector.shape_cast %25 : vector<1x4xf32> to vector<1x4x1xf32>
    %27 = vector.broadcast %26 : vector<1x4x1xf32> to vector<1x4x256xf32>
    %28 = arith.mulf %0, %27 : vector<1x4x256xf32>
    %c0_16 = arith.constant 0 : index
    %c0_17 = arith.constant 0 : index
    %c0_18 = arith.constant 0 : index
    %29 = vector.load %arg6[%c0_16, %c0_17, %c0_18] : memref<1x4x256xf32, #tpu.memory_space<vmem>>, vector<1x4x256xf32>
    tpu.vector_store %arg6[%c0_16, %c0_17, %c0_18], %28 {strides = array<i32>} : memref<1x4x256xf32, #tpu.memory_space<vmem>>, vector<1x4x256xf32>,
    return
  }
  func.func @transform_0(%arg0: i32) -> (i32, i32, i32) {
    %c0_i32 = arith.constant 0 : i32
    %c0_i32_0 = arith.constant 0 : i32
    %c0_i32_1 = arith.constant 0 : i32
    return %arg0, %c0_i32, %c0_i32_0 : i32, i32, i32
  }
  func.func @transform_1(%arg0: i32) -> (i32, i32) {
    %c0_i32 = arith.constant 0 : i32
    %c0_i32_0 = arith.constant 0 : i32
    %c0_i32_1 = arith.constant 0 : i32
    return %c0_i32, %c0_i32_0 : i32, i32
  }
  func.func @transform_2(%arg0: i32) -> (i32, i32) {
    %c0_i32 = arith.constant 0 : i32
    %c0_i32_0 = arith.constant 0 : i32
    %c0_i32_1 = arith.constant 0 : i32
    return %c0_i32, %c0_i32_0 : i32, i32
  }
  func.func @transform_3(%arg0: i32) -> (i32, i32) {
    %c0_i32 = arith.constant 0 : i32
    %c0_i32_0 = arith.constant 0 : i32
    %c0_i32_1 = arith.constant 0 : i32
    return %c0_i32, %c0_i32_0 : i32, i32
  }
  func.func @transform_4(%arg0: i32) -> (i32, i32) {
    %c0_i32 = arith.constant 0 : i32
    %c0_i32_0 = arith.constant 0 : i32
    %c0_i32_1 = arith.constant 0 : i32
    return %c0_i32, %c0_i32_0 : i32, i32
  }
  func.func @transform_5(%arg0: i32) -> (i32, i32, i32) {
    %c0_i32 = arith.constant 0 : i32
    %c0_i32_0 = arith.constant 0 : i32
    %c0_i32_1 = arith.constant 0 : i32
    return %arg0, %c0_i32, %c0_i32_0 : i32, i32, i32
  }
}

</mosaic_0001>

<llo_original>
// kernel: tpu_custom_call.1
$region0: #{tpu_custom_call.1}
  #allocation0 [shape = 'u32[]', space=smem, size = 0x4, offset = 0x4, fixed_abs, tag = 'smem constant byte address 0x4 - core index']
  #allocation1 [shape = 'u32[144,128]{1,0:T(1,128)}', space=vmem, size = 0x12000, scoped, tag = 'internal scratch']
  %s0 = inlined_call_operand.hbm [shape: f32[2,4,256], index: 0, kind: input, shape index: {}]
  %s1 = inlined_call_operand.vmem [shape: f32[4,2], index: 1, kind: input, shape index: {}]
  %s2 = inlined_call_operand.vmem [shape: f32[1,2], index: 2, kind: input, shape index: {}]
  %s3 = inlined_call_operand.vmem [shape: f32[2,4], index: 3, kind: input, shape index: {}]
  %s4 = inlined_call_operand.vmem [shape: f32[1,4], index: 4, kind: input, shape index: {}]
  %s5 = inlined_call_operand.hbm [shape: f32[2,4,256], index: 5, kind: output, shape index: {}]
  %s6 = sld [smem:[#allocation0]]
  $region57: #{tpu_custom_call.1} parent=0
    _
  %s8 = ssub.s32 1, %s6
  %s9 = scalar_select 0, %s8, %s6
  $region1: #{tpu_custom_call.1} parent=0
    #allocation2 [shape = 'u8[8192]{0}', space=vmem, size = 0x2000, scoped, tag = 'input window, operand 0']
    #allocation3 [shape = 's32[2]{0}', space=sflag, size = 0x8, scoped, tag = 'scoped memory for tpu_custom_call.1']
    #allocation4 [shape = 's32[2]{0}', space=sflag, size = 0x8, scoped, tag = 'scoped memory for tpu_custom_call.1']
    #allocation5 [shape = 'u8[8192]{0}', space=vmem, size = 0x2000, scoped, tag = 'output window, operand 0']
    %10 = vsyncpa [#allocation3], 0
    %s11 = scalar_lea.sflag [#allocation3], 1
    %12 = vsyncpa %s11, 0
    %13 = vsyncpa [#allocation4], 0
    %s14 = scalar_lea.sflag [#allocation4], 1
    %15 = vsyncpa %s14, 0
    loop: start=0, step=1, limit=4
    $region2: #{tpu_custom_call.1} parent=1 // loop_pre_header
      _
    $region3: #{tpu_custom_call.1} parent=1 // loop_header
      %s17 = sphi 0, %s21
      %p18 = scmp.ge.s32.totalorder %s17, 4
      %s27 = sphi 0, %s29
      %s30 = sphi 0, %s27
      %s31 = sphi 0, %s30
      %s47 = sphi 0, %s31
      %s51 = sphi 0, %s51
      %s53 = sphi 0, %s51
      %s54 = sphi 0, %s53
      %s68 = sphi 0, %s54
      %s72 = sphi 0, %s72
      %s74 = sphi 0, %s72
      %s75 = sphi 0, %s74
      %s89 = sphi 0, %s75
      %s93 = sphi 0, %s93
      %s95 = sphi 0, %s93
      %s96 = sphi 0, %s95
      %s110 = sphi 0, %s96
      %s114 = sphi 0, %s114
      %s116 = sphi 0, %s114
      %s117 = sphi 0, %s116
      %s131 = sphi 0, %s117
      %s137 = sphi 0, %s139
      %s140 = sphi 0, %s137
      %s141 = sphi 0, %s140
      %s157 = sphi 0, %s141
    $region4: #{tpu_custom_call.1} parent=1 // loop_header_branch
      %20 = sbr.rel (%p18) target = $region8
    $region5: #{tpu_custom_call.1} parent=1 // loop_body
      %s22 = ssub.s32 %s17, 1
      %s23 = ssub.s32 %s17, 2
      %s24 = sadd.s32 %s17, 1
      %s25 = ssub.s32 %s17, %s24
      %p26 = scmp.eq.s32.totalorder %s25, 0
      %s28 = sadd.s32 %s27, 1
      %s29 = scalar_select %p26, %s27, %s28
      %p32 = pneg %p26
      %p33 = scmp.eq.s32.totalorder %s17, 1
      %p34 = por %p32, %p33
      %p35 = scmp.ne.s32.totalorder %s27, %s30
      %p36 = scmp.eq.s32.totalorder %s17, 0
      %p37 = por %p35, %p36
      %p38 = scmp.ne.s32.totalorder %s27, %s30
      %p39 = scmp.eq.s32.totalorder %s22, 1
      %p40 = por %p38, %p39
      %p41 = scmp.ne.s32.totalorder %s30, %s31
      %p42 = scmp.eq.s32.totalorder %s22, 0
      %p43 = por %p41, %p42
      %p44 = scmp.ne.s32.totalorder %s30, %s31
      %p45 = scmp.eq.s32.totalorder %s23, 1
      %p46 = por %p44, %p45
      %p48 = scmp.ne.s32.totalorder %s31, %s47
      %p49 = scmp.eq.s32.totalorder %s23, 0
      %p50 = por %p48, %p49
      %s52 = sadd.s32 %s51, 1
      %p55 = scmp.eq.s32.totalorder %s17, 1
      %p56 = scmp.ne.s32.totalorder %s51, %s53
      %p57 = scmp.eq.s32.totalorder %s17, 0
      %p58 = por %p56, %p57
      %p59 = scmp.ne.s32.totalorder %s51, %s53
      %p60 = scmp.eq.s32.totalorder %s22, 1
      %p61 = por %p59, %p60
      %p62 = scmp.ne.s32.totalorder %s53, %s54
      %p63 = scmp.eq.s32.totalorder %s22, 0
      %p64 = por %p62, %p63
      %p65 = scmp.ne.s32.totalorder %s53, %s54
      %p66 = scmp.eq.s32.totalorder %s23, 1
      %p67 = por %p65, %p66
      %p69 = scmp.ne.s32.totalorder %s54, %s68
      %p70 = scmp.eq.s32.totalorder %s23, 0
      %p71 = por %p69, %p70
      %s73 = sadd.s32 %s72, 1
      %p76 = scmp.eq.s32.totalorder %s17, 1
      %p77 = scmp.ne.s32.totalorder %s72, %s74
      %p78 = scmp.eq.s32.totalorder %s17, 0
      %p79 = por %p77, %p78
      %p80 = scmp.ne.s32.totalorder %s72, %s74
      %p81 = scmp.eq.s32.totalorder %s22, 1
      %p82 = por %p80, %p81
      %p83 = scmp.ne.s32.totalorder %s74, %s75
      %p84 = scmp.eq.s32.totalorder %s22, 0
      %p85 = por %p83, %p84
      %p86 = scmp.ne.s32.totalorder %s74, %s75
      %p87 = scmp.eq.s32.totalorder %s23, 1
      %p88 = por %p86, %p87
      %p90 = scmp.ne.s32.totalorder %s75, %s89
      %p91 = scmp.eq.s32.totalorder %s23, 0
      %p92 = por %p90, %p91
      %s94 = sadd.s32 %s93, 1
      %p97 = scmp.eq.s32.totalorder %s17, 1
      %p98 = scmp.ne.s32.totalorder %s93, %s95
      %p99 = scmp.eq.s32.totalorder %s17, 0
      %p100 = por %p98, %p99
      %p101 = scmp.ne.s32.totalorder %s93, %s95
      %p102 = scmp.eq.s32.totalorder %s22, 1
      %p103 = por %p101, %p102
      %p104 = scmp.ne.s32.totalorder %s95, %s96
      %p105 = scmp.eq.s32.totalorder %s22, 0
      %p106 = por %p104, %p105
      %p107 = scmp.ne.s32.totalorder %s95, %s96
      %p108 = scmp.eq.s32.totalorder %s23, 1
      %p109 = por %p107, %p108
      %p111 = scmp.ne.s32.totalorder %s96, %s110
      %p112 = scmp.eq.s32.totalorder %s23, 0
      %p113 = por %p111, %p112
      %s115 = sadd.s32 %s114, 1
      %p118 = scmp.eq.s32.totalorder %s17, 1
      %p119 = scmp.ne.s32.totalorder %s114, %s116
      %p120 = scmp.eq.s32.totalorder %s17, 0
      %p121 = por %p119, %p120
      %p122 = scmp.ne.s32.totalorder %s114, %s116
      %p123 = scmp.eq.s32.totalorder %s22, 1
      %p124 = por %p122, %p123
      %p125 = scmp.ne.s32.totalorder %s116, %s117
      %p126 = scmp.eq.s32.totalorder %s22, 0
      %p127 = por %p125, %p126
      %p128 = scmp.ne.s32.totalorder %s116, %s117
      %p129 = scmp.eq.s32.totalorder %s23, 1
      %p130 = por %p128, %p129
      %p132 = scmp.ne.s32.totalorder %s117, %s131
      %p133 = scmp.eq.s32.totalorder %s23, 0
      %p134 = por %p132, %p133
      %s135 = ssub.s32 %s17, %s24
      %p136 = scmp.eq.s32.totalorder %s135, 0
      %s138 = sadd.s32 %s137, 1
      %s139 = scalar_select %p136, %s137, %s138
      %p142 = pneg %p136
      %p143 = scmp.eq.s32.totalorder %s17, 1
      %p144 = por %p142, %p143
      %p145 = scmp.ne.s32.totalorder %s137, %s140
      %p146 = scmp.eq.s32.totalorder %s17, 0
      %p147 = por %p145, %p146
      %p148 = scmp.ne.s32.totalorder %s137, %s140
      %p149 = scmp.eq.s32.totalorder %s22, 1
      %p150 = por %p148, %p149
      %p151 = scmp.ne.s32.totalorder %s140, %s141
      %p152 = scmp.eq.s32.totalorder %s22, 0
      %p153 = por %p151, %p152
      %p154 = scmp.ne.s32.totalorder %s140, %s141
      %p155 = scmp.eq.s32.totalorder %s23, 1
      %p156 = por %p154, %p155
      %p158 = scmp.ne.s32.totalorder %s141, %s157
      %p159 = scmp.eq.s32.totalorder %s23, 0
      %p160 = por %p158, %p159
      %p161 = scmp.le.s32.totalorder 1, %s17
      %p162 = scmp.lt.s32.totalorder %s17, 3
      %p163 = pnand %p161, %p162
      %p164 = pneg %p163
      // Predicated region
      $region9: #{tpu_custom_call.1} parent=5 // pred_check
        _
      $region10: #{tpu_custom_call.1} parent=5 // pred_check_branch
        %166 = sbr.rel (%p163) target = $region12
      $region11: #{tpu_custom_call.1} parent=5 // pred_region
        %s167 = ssub.s32 %s17, 1
        // Predicated region
        $region13: #{tpu_custom_call.1} parent=11 // pred_check
          %p168 = pneg %p64
        $region14: #{tpu_custom_call.1} parent=11 // pred_check_branch
          %170 = sbr.rel (%p168) target = $region16
        $region15: #{tpu_custom_call.1} parent=11 // pred_region
          _
        $region16: #{tpu_custom_call.1} parent=11 // pred_fallthru
          _
        // Predicated region
        $region17: #{tpu_custom_call.1} parent=11 // pred_check
          %p171 = pneg %p85
        $region18: #{tpu_custom_call.1} parent=11 // pred_check_branch
          %173 = sbr.rel (%p171) target = $region20
        $region19: #{tpu_custom_call.1} parent=11 // pred_region
          _
        $region20: #{tpu_custom_call.1} parent=11 // pred_fallthru
          _
        // Predicated region
        $region21: #{tpu_custom_call.1} parent=11 // pred_check
          %p174 = pneg %p106
        $region22: #{tpu_custom_call.1} parent=11 // pred_check_branch
          %176 = sbr.rel (%p174) target = $region24
        $region23: #{tpu_custom_call.1} parent=11 // pred_region
          _
        $region24: #{tpu_custom_call.1} parent=11 // pred_fallthru
          _
        // Predicated region
        $region25: #{tpu_custom_call.1} parent=11 // pred_check
          %p177 = pneg %p127
        $region26: #{tpu_custom_call.1} parent=11 // pred_check_branch
          %179 = sbr.rel (%p177) target = $region28
        $region27: #{tpu_custom_call.1} parent=11 // pred_region
          _
        $region28: #{tpu_custom_call.1} parent=11 // pred_fallthru
          _
      $region12: #{tpu_custom_call.1} parent=5 // pred_fallthru
        _
      %p180 = scmp.lt.s32.totalorder %s17, 2
      // Predicated region
      $region29: #{tpu_custom_call.1} parent=5 // pred_check
        %p181 = pneg %p180
      $region30: #{tpu_custom_call.1} parent=5 // pred_check_branch
        %183 = sbr.rel (%p181) target = $region32
      $region31: #{tpu_custom_call.1} parent=5 // pred_region
        // Predicated region
        $region33: #{tpu_custom_call.1} parent=31 // pred_check
          %p184 = pneg %p37
        $region34: #{tpu_custom_call.1} parent=31 // pred_check_branch
          %186 = sbr.rel (%p184) target = $region36
        $region35: #{tpu_custom_call.1} parent=31 // pred_region
          %s187 = sand.u32 %s27, 1
          %s188 = scalar_lea.sflag [#allocation3], %s187
          %s189 = sand.u32 %s27, 1
          %s190 = smul.addr %s189, 8
          %s191 = scalar_lea.vmem [#allocation2], %s190
          %s193 = ssub.s32 128, 128
          %194 = vsyncadd %s188, %s193
          %s195 = smul.addr %s17, 2
          %s196 = smul.addr %s195, 64
          %s197 = scalar_lea.hbm %s0, %s196
          %s199 = sshll.u32 %s191, 4
          %s200 = int_to_ptr.vmem [resolvable:$true] %s199
          %202 = dma.hbm_to_vmem [thread:$0]  %s197, 128, %s200, %s188
        $region36: #{tpu_custom_call.1} parent=31 // pred_fallthru
          _
      $region32: #{tpu_custom_call.1} parent=5 // pred_fallthru
        _
      %p203 = scmp.le.s32.totalorder 1, %s17
      %p204 = scmp.lt.s32.totalorder %s17, 3
      %p205 = pnand %p203, %p204
      %p206 = pneg %p205
      // Predicated region
      $region37: #{tpu_custom_call.1} parent=5 // pred_check
        _
      $region38: #{tpu_custom_call.1} parent=5 // pred_check_branch
        %208 = sbr.rel (%p205) target = $region40
      $region39: #{tpu_custom_call.1} parent=5 // pred_region
        %s209 = ssub.s32 %s17, 1
        %s210 = sand.u32 %s30, 1
        %s211 = scalar_lea.sflag [#allocation3], %s210
        %s212 = sand.u32 %s30, 1
        %s213 = smul.addr %s212, 8
        %s214 = scalar_lea.vmem [#allocation2], %s213
        // Predicated region
        $region41: #{tpu_custom_call.1} parent=39 // pred_check
          %p215 = pneg %p43
        $region42: #{tpu_custom_call.1} parent=39 // pred_check_branch
          %217 = sbr.rel (%p215) target = $region44
        $region43: #{tpu_custom_call.1} parent=39 // pred_region
          %218 = dma.done %s211, 128
        $region44: #{tpu_custom_call.1} parent=39 // pred_fallthru
          _
        %s219 = sand.u32 %s30, 1
        %s220 = scalar_lea.sflag [#allocation3], %s219
        %s221 = sand.u32 %s30, 1
        %s222 = smul.addr %s221, 8
        %s223 = scalar_lea.vmem [#allocation2], %s222
        %p224 = pneg %p43
        %p225 = pneg %p40
        %p226 = pneg %p64
        %p227 = pneg %p61
        %p228 = pneg %p85
        %p229 = pneg %p82
        %p230 = pneg %p106
        %p231 = pneg %p103
        %p232 = pneg %p127
        %p233 = pneg %p124
        %p234 = pneg %p153
        %p235 = pneg %p150
        %s236 = sand.u32 %s140, 1
        %s237 = scalar_lea.sflag [#allocation4], %s236
        %s238 = sand.u32 %s140, 1
        %s239 = smul.addr %s238, 8
        %s240 = scalar_lea.vmem [#allocation5], %s239
        %v241 = vld [vmem:[%s214] sm:$0xff]
        %v243 = vcombine.high %v241, %v241
        %vm245 = vcmask 1043456
        %v246 = vsel %vm245, %v241, 0.0
        %v247 = vsel %vm245, %v243, 0.0
        %v248 = vadd.f32 %v246, %v247
        %249 = vadd.xlane.f32.xlu0 %v248
        %v250 = vpop.xlane.xlu0 %249
        %v251 = vrcp.pop 256.0
        %v252 = vmul.f32 %v250, %v251
        %v253 = vsel %vm245, %v241, -inf
        %v254 = vsel %vm245, %v243, -inf
        %v255 = vmax.f32 %v253, %v254
        %256 = vmax.xlane.f32.xlu0 %v255
        %v257 = vpop.xlane.xlu0 %256
        %v259 = vlaneseq
        %v260 = vand.u32 %v259, 127
        %v261 = vlaneseq
        %v262 = vshrl.u32 %v261, 7
        %v263 = vsub.s32 %v260, %v262
        %v264 = vrot.slane %v252, %v263
        %v267 = vlaneseq
        %v268 = vshrl.u32 %v267, 7
        %v269 = vsub.s32 %v260, %v268
        %v270 = vrot.slane %v257, %v269
        %vm272 = vcmask 1040384
        %v273 = vsel %vm272, %v264, %v270
        %v274 = vld [vmem:[%s1] sm:$0xf]
        %v275 = vld [vmem:[%s2] sm:$0x1]
        %v277 = vlaneseq
        %v278 = vshrl.u32 %v277, 7
        %v279 = vsub.s32 0, %v278
        %v280 = vrot.slane %v275, %v279
        %vm282 = vcmask 31744
        %v284 = vsel %vm282, %v273, 0
        %v287 = vsel %vm245, %v274, 0
        %289 = vmatprep.subr.mxu0 0.0
        %290 = vmatpush1.msra.mxu0 0.0
        %291 = vmatprep.subr.mxu0 0.0
        %292 = vmatpush1.msra.mxu0 0.0
        %293 = vmatprep.subr.mxu0 0.0
        %294 = vmatpush1.msra.mxu0 0.0
        %295 = vmatprep.subr.mxu0 0.0
        %296 = vmatpush1.msra.mxu0 0.0
        %297 = vmatprep.subr.mxu0 0.0
        %298 = vmatpush1.msra.mxu0 0.0
        %299 = vmatprep.subr.mxu0 0.0
        %300 = vmatpush1.msra.mxu0 0.0
        %301 = vmatprep.subr.mxu0 0.0
        %302 = vmatpush1.msra.mxu0 0.0
        %303 = vmatprep.subr.mxu0 0.0
        %304 = vmatpush1.msra.mxu0 0.0
        %305 = vmatprep.subr.mxu0 0.0
        %306 = vmatpush1.msra.mxu0 0.0
        %307 = vmatprep.subr.mxu0 0.0
        %308 = vmatpush1.msra.mxu0 0.0
        %309 = vmatprep.subr.mxu0 0.0
        %310 = vmatpush1.msra.mxu0 0.0
        %311 = vmatprep.subr.mxu0 0.0
        %312 = vmatpush1.msra.mxu0 0.0
        %313 = vmatprep.subr.mxu0 0.0
        %314 = vmatpush1.msra.mxu0 0.0
        %315 = vmatprep.subr.mxu0 0.0
        %316 = vmatpush1.msra.mxu0 0.0
        %317 = vmatprep.subr.mxu0 0.0
        %318 = vmatpush1.msra.mxu0 0.0
        %319 = vmatprep.subr.mxu0 0.0
        %320 = vmatpush1.msra.mxu0 %v287
        %321 = vmatprep.subr.mxu0 0.0
        %322 = vmatpush2.msra.mxu0 0.0
        %323 = vmatprep.subr.mxu0 0.0
        %324 = vmatpush2.msra.mxu0 0.0
        %325 = vmatprep.subr.mxu0 0.0
        %326 = vmatpush2.msra.mxu0 0.0
        %327 = vmatprep.subr.mxu0 0.0
        %328 = vmatpush2.msra.mxu0 0.0
        %329 = vmatprep.subr.mxu0 0.0
        %330 = vmatpush2.msra.mxu0 0.0
        %331 = vmatprep.subr.mxu0 0.0
        %332 = vmatpush2.msra.mxu0 0.0
        %333 = vmatprep.subr.mxu0 0.0
        %334 = vmatpush2.msra.mxu0 0.0
        %335 = vmatprep.subr.mxu0 0.0
        %336 = vmatpush2.msra.mxu0 0.0
        %337 = vmatprep.subr.mxu0 0.0
        %338 = vmatpush2.msra.mxu0 0.0
        %339 = vmatprep.subr.mxu0 0.0
        %340 = vmatpush2.msra.mxu0 0.0
        %341 = vmatprep.subr.mxu0 0.0
        %342 = vmatpush2.msra.mxu0 0.0
        %343 = vmatprep.subr.mxu0 0.0
        %344 = vmatpush2.msra.mxu0 0.0
        %345 = vmatprep.subr.mxu0 0.0
        %346 = vmatpush2.msra.mxu0 0.0
        %347 = vmatprep.subr.mxu0 0.0
        %348 = vmatpush2.msra.mxu0 0.0
        %349 = vmatprep.subr.mxu0 0.0
        %350 = vmatpush2.msra.mxu0 0.0
        %351 = vmatprep.subr.mxu0 0.0
        %352 = vmatpush2.msra.mxu0 0.0
        %353 = vmatprep.mubr.f32.mxu0 0.0
        %354 = vmatmul.mubr.f32.gmra.mxu0 %v284
        %v355 = vpop.f32.mrf.mxu0
        %v356 = vadd.f32 %v280, %v355
        %v357 = vpop.f32.mrf.mxu0
        %358 = vdwg.mxu0
        %v359 = vmax.f32 %v356, 0.0
        %v360 = vld [vmem:[%s3] sm:$0x3]
        %v361 = vld [vmem:[%s4] sm:$0x1]
        %v363 = vlaneseq
        %v364 = vshrl.u32 %v363, 7
        %v365 = vsub.s32 0, %v364
        %v366 = vrot.slane %v361, %v365
        %vm368 = vcmask 15360
        %v370 = vsel %vm368, %v359, 0
        %vm372 = vcmask 1041408
        %v374 = vsel %vm372, %v360, 0
        %376 = vmatprep.subr.mxu0 0.0
        %377 = vmatpush1.msra.mxu0 0.0
        %378 = vmatprep.subr.mxu0 0.0
        %379 = vmatpush1.msra.mxu0 0.0
        %380 = vmatprep.subr.mxu0 0.0
        %381 = vmatpush1.msra.mxu0 0.0
        %382 = vmatprep.subr.mxu0 0.0
        %383 = vmatpush1.msra.mxu0 0.0
        %384 = vmatprep.subr.mxu0 0.0
        %385 = vmatpush1.msra.mxu0 0.0
        %386 = vmatprep.subr.mxu0 0.0
        %387 = vmatpush1.msra.mxu0 0.0
        %388 = vmatprep.subr.mxu0 0.0
        %389 = vmatpush1.msra.mxu0 0.0
        %390 = vmatprep.subr.mxu0 0.0
        %391 = vmatpush1.msra.mxu0 0.0
        %392 = vmatprep.subr.mxu0 0.0
        %393 = vmatpush1.msra.mxu0 0.0
        %394 = vmatprep.subr.mxu0 0.0
        %395 = vmatpush1.msra.mxu0 0.0
        %396 = vmatprep.subr.mxu0 0.0
        %397 = vmatpush1.msra.mxu0 0.0
        %398 = vmatprep.subr.mxu0 0.0
        %399 = vmatpush1.msra.mxu0 0.0
        %400 = vmatprep.subr.mxu0 0.0
        %401 = vmatpush1.msra.mxu0 0.0
        %402 = vmatprep.subr.mxu0 0.0
        %403 = vmatpush1.msra.mxu0 0.0
        %404 = vmatprep.subr.mxu0 0.0
        %405 = vmatpush1.msra.mxu0 0.0
        %406 = vmatprep.subr.mxu0 0.0
        %407 = vmatpush1.msra.mxu0 %v374
        %408 = vmatprep.subr.mxu0 0.0
        %409 = vmatpush2.msra.mxu0 0.0
        %410 = vmatprep.subr.mxu0 0.0
        %411 = vmatpush2.msra.mxu0 0.0
        %412 = vmatprep.subr.mxu0 0.0
        %413 = vmatpush2.msra.mxu0 0.0
        %414 = vmatprep.subr.mxu0 0.0
        %415 = vmatpush2.msra.mxu0 0.0
        %416 = vmatprep.subr.mxu0 0.0
        %417 = vmatpush2.msra.mxu0 0.0
        %418 = vmatprep.subr.mxu0 0.0
        %419 = vmatpush2.msra.mxu0 0.0
        %420 = vmatprep.subr.mxu0 0.0
        %421 = vmatpush2.msra.mxu0 0.0
        %422 = vmatprep.subr.mxu0 0.0
        %423 = vmatpush2.msra.mxu0 0.0
        %424 = vmatprep.subr.mxu0 0.0
        %425 = vmatpush2.msra.mxu0 0.0
        %426 = vmatprep.subr.mxu0 0.0
        %427 = vmatpush2.msra.mxu0 0.0
        %428 = vmatprep.subr.mxu0 0.0
        %429 = vmatpush2.msra.mxu0 0.0
        %430 = vmatprep.subr.mxu0 0.0
        %431 = vmatpush2.msra.mxu0 0.0
        %432 = vmatprep.subr.mxu0 0.0
        %433 = vmatpush2.msra.mxu0 0.0
        %434 = vmatprep.subr.mxu0 0.0
        %435 = vmatpush2.msra.mxu0 0.0
        %436 = vmatprep.subr.mxu0 0.0
        %437 = vmatpush2.msra.mxu0 0.0
        %438 = vmatprep.subr.mxu0 0.0
        %439 = vmatpush2.msra.mxu0 0.0
        %440 = vmatprep.mubr.f32.mxu0 0.0
        %441 = vmatmul.mubr.f32.gmra.mxu0 %v370
        %v442 = vpop.f32.mrf.mxu0
        %v443 = vadd.f32 %v366, %v442
        %v444 = vpop.f32.mrf.mxu0
        %445 = vdwg.mxu0
        %v447 = vrot.slane %v443, 1
        %v449 = vadd.f32 %v443, %v447
        %v450 = vxor.u32 %v449, 2147483648
        %v451 = vmul.f32 %v450, 1.442695
        %v452 = vpow.pop %v451
        %v453 = vadd.f32 %v452, 1.0
        %v454 = vrcp.pop %v453
        %v455 = vmul.f32 1.0, %v454
        %v456 = vlaneseq
        %v457 = vshrl.u32 %v456, 7
        %v458 = vsub.s32 0, %v457
        %v459 = vrot.slane %v455, %v458
        %461 = vbcast.lane.b32.xlu0 %v459, 256
        %v462 = vpop.permute.xlu0 %461
        %v465 = vunpack.c.l.s4 839922192
        %v466 = vunpack.c.0.s8 %v465
        %v467 = vlaneseq
        %v468 = vshrl.u32 %v467, 7
        %v469 = vsub.s32 %v466, %v468
        %v470 = vrot.slane %v462, %v469
        %v472 = vmul.f32 %v241, %v470
        %473 = vst [vmem:[%s240] sm:$0xff] %v472
        %s474 = sand.u32 %s140, 1
        %s475 = scalar_lea.sflag [#allocation4], %s474
        %s476 = sand.u32 %s140, 1
        %s477 = smul.addr %s476, 8
        %s478 = scalar_lea.vmem [#allocation5], %s477
        // Predicated region
        $region45: #{tpu_custom_call.1} parent=39 // pred_check
          %p479 = pneg %p150
        $region46: #{tpu_custom_call.1} parent=39 // pred_check_branch
          %481 = sbr.rel (%p479) target = $region48
        $region47: #{tpu_custom_call.1} parent=39 // pred_region
          %s483 = ssub.s32 128, 128
          %484 = vsyncadd %s475, %s483
          %s485 = smul.addr %s22, 2
          %s486 = smul.addr %s485, 64
          %s487 = scalar_lea.hbm %s5, %s486
          %s489 = sshll.u32 %s478, 4
          %s490 = int_to_ptr.vmem [resolvable:$true] %s489
          %492 = dma.vmem_to_hbm [thread:$0]  %s490, 128, %s487, %s475
        $region48: #{tpu_custom_call.1} parent=39 // pred_fallthru
          _
      $region40: #{tpu_custom_call.1} parent=5 // pred_fallthru
        _
      %p493 = scmp.le.s32.totalorder 2, %s17
      // Predicated region
      $region49: #{tpu_custom_call.1} parent=5 // pred_check
        %p494 = pneg %p493
      $region50: #{tpu_custom_call.1} parent=5 // pred_check_branch
        %496 = sbr.rel (%p494) target = $region52
      $region51: #{tpu_custom_call.1} parent=5 // pred_region
        %s497 = ssub.s32 %s17, 2
        // Predicated region
        $region53: #{tpu_custom_call.1} parent=51 // pred_check
          %p498 = pneg %p156
        $region54: #{tpu_custom_call.1} parent=51 // pred_check_branch
          %500 = sbr.rel (%p498) target = $region56
        $region55: #{tpu_custom_call.1} parent=51 // pred_region
          %s501 = sand.u32 %s141, 1
          %s502 = scalar_lea.sflag [#allocation4], %s501
          %s503 = sand.u32 %s141, 1
          %s504 = smul.addr %s503, 8
          %s505 = scalar_lea.vmem [#allocation5], %s504
          %506 = dma.done %s502, 128
        $region56: #{tpu_custom_call.1} parent=51 // pred_fallthru
          _
      $region52: #{tpu_custom_call.1} parent=5 // pred_fallthru
        _
    $region6: #{tpu_custom_call.1} parent=1 // loop_footer
      %s21 = sadd.s32 1, %s17
    $region7: #{tpu_custom_call.1} parent=1 // loop_footer_branch
      %16 = sbr.rel target = $region3
    $region8: #{tpu_custom_call.1} parent=1 // loop_exit
      _
    %507 = vsyncpa [#allocation3], 1
    %s508 = scalar_lea.sflag [#allocation3], 1
    %509 = vsyncpa %s508, 1
    %510 = vsyncpa [#allocation4], 1
    %s511 = scalar_lea.sflag [#allocation4], 1
    %512 = vsyncpa %s511, 1

</llo_original>
